<compile_context>
chip_gen: v5e
topology: v5e:2x2
jax: 0.10.0
libtpu: 0.0.40
codegen_flags: <defaults>
</compile_context>

<pallas_src>
import functools

import jax
import jax.numpy as jnp
from jax.experimental import pallas as pl
from jax.experimental.pallas import tpu as pltpu

_INV_SQRT2 = 0.7071067811865476
_SQRT_2_OVER_PI = 0.7978845608028654


def _geglu_kernel(x_ref, wv_ref, wg_ref, bv_ref, bg_ref, o_ref, acc_v, acc_g, *,
                  approximate):
    k = pl.program_id(2)

    @pl.when(k == 0)
    def _():
        # Fold the bias into the accumulator init (the init store happens anyway).
        acc_v[...] = jnp.broadcast_to(bv_ref[...].astype(jnp.float32), acc_v.shape)
        acc_g[...] = jnp.broadcast_to(bg_ref[...].astype(jnp.float32), acc_g.shape)

    x = x_ref[...]
    acc_v[...] += jnp.dot(x, wv_ref[...], preferred_element_type=jnp.float32)
    acc_g[...] += jnp.dot(x, wg_ref[...], preferred_element_type=jnp.float32)

    @pl.when(k == pl.num_programs(2) - 1)
    def _():
        val = acc_v[...]
        gate = acc_g[...]
        if approximate:
            # tanh GELU: transcendental runs on the EUP slot, overlapping VPU work.
            g = 0.5 * gate * (1.0 + jnp.tanh(
                _SQRT_2_OVER_PI * (gate + 0.044715 * gate * gate * gate)))
        else:
            # Exact (erf-based) GELU matches torch.nn.functional.gelu's default.
            g = 0.5 * gate * (1.0 + jax.lax.erf(gate * _INV_SQRT2))
        o_ref[...] = (val * g).astype(o_ref.dtype)


def _cdiv(a, b):
    return (a + b - 1) // b


def _round_up(a, b):
    return _cdiv(a, b) * b


def _pick_tile(dim, t_default, granule=128):
    """Largest multiple of `granule` <= t_default that evenly divides `dim` (or None)."""
    if dim % granule != 0:
        return None
    t = min(t_default, dim)
    t = (t // granule) * granule
    while dim % t != 0:
        t -= granule
    return t


def geglu(x, w, b, *, tm=512, tn=512, tk=512, compute_dtype=None,
          approximate_gelu=False):
    """GEGLU: proj = x @ w + b; val, gate = split(proj, 2, -1); return val * gelu(gate).

    x: (..., dim_in), w: (dim_in, 2*dim_out), b: (2*dim_out,)
    compute_dtype: optional cast of x/w (e.g. jnp.bfloat16) for MXU-native operands;
                   accumulation stays f32. Changes numerics slightly (opt-in).
    """
    dim_in = x.shape[-1]
    assert w.shape[0] == dim_in and w.shape[1] % 2 == 0
    dim_out = w.shape[1] // 2
    assert b.shape == (2 * dim_out,)

    lead_shape = x.shape[:-1]
    x2d = x.reshape(-1, dim_in)
    M = x2d.shape[0]
    out_dtype = x.dtype

    if compute_dtype is not None:
        x2d = x2d.astype(compute_dtype)
        w = w.astype(compute_dtype)

    # ---- M tiling: never pad M; Pallas clips partial edge-block output stores. ----
    tm = max(16, min(tm, _round_up(M, 16)))
    # v7x megacore: keep >= 2 blocks on the parallel M axis when M allows.
    if M >= 32 and _cdiv(M, tm) < 2:
        tm = max(16, _round_up(_cdiv(M, 2), 16))
    grid_m = _cdiv(M, tm)

    kernel = functools.partial(_geglu_kernel, approximate=approximate_gelu)
    scratch = [pltpu.VMEM((tm, tn if (t := _pick_tile(dim_out, tn)) is None else t),
                          jnp.float32)]  # placeholder, rebuilt below per path
    del scratch  # (scratch shapes are built per-path below)

    tn_fast = _pick_tile(dim_out, tn)
    tk_fast = _pick_tile(dim_in, tk)

    compiler_params = pltpu.CompilerParams(
        dimension_semantics=("parallel", "parallel", "arbitrary"))

    if tn_fast is not None and tk_fast is not None:
        # ---- Fast path: original w/b passed twice, gate half via index_map offset. ----
        tn_f, tk_f = tn_fast, tk_fast
        gate_off = dim_out // tn_f
        b2d = b.reshape(1, 2 * dim_out)
        grid = (grid_m, dim_out // tn_f, dim_in // tk_f)

        out = pl.pallas_call(
            kernel,
            out_shape=jax.ShapeDtypeStruct((M, dim_out), out_dtype),
            grid_spec=pltpu.PrefetchScalarGridSpec(
                num_scalar_prefetch=0,
                grid=grid,
                in_specs=[
                    pl.BlockSpec((tm, tk_f), lambda i, j, k: (i, k)),                    # x
                    pl.BlockSpec((tk_f, tn_f), lambda i, j, k: (k, j)),                  # W: val half
                    pl.BlockSpec((tk_f, tn_f),
                                 lambda i, j, k, go=gate_off: (k, j + go)),              # W: gate half
                    pl.BlockSpec((1, tn_f), lambda i, j, k: (0, j)),                     # b: val half
                    pl.BlockSpec((1, tn_f),
                                 lambda i, j, k, go=gate_off: (0, j + go)),              # b: gate half
                ],
                out_specs=pl.BlockSpec((tm, tn_f), lambda i, j, k: (i, j)),
                scratch_shapes=[
                    pltpu.VMEM((tm, tn_f), jnp.float32),  # val accumulator
                    pltpu.VMEM((tm, tn_f), jnp.float32),  # gate accumulator
                ],
            ),
            compiler_params=compiler_params,
        )(x2d, w, w, b2d, b2d)
        return out.reshape(*lead_shape, dim_out)

    # ---- Fallback (odd dims): slice/zero-pad weight halves along K and N. ----
    tn = max(128, min(tn, _round_up(dim_out, 128)))
    tk = max(128, min(tk, _round_up(dim_in, 128)))
    Np = _round_up(dim_out, tn)
    Kp = _round_up(dim_in, tk)

    wv = jnp.pad(w[:, :dim_out], ((0, Kp - dim_in), (0, Np - dim_out)))
    wg = jnp.pad(w[:, dim_out:], ((0, Kp - dim_in), (0, Np - dim_out)))
    bv = jnp.pad(b[:dim_out].reshape(1, dim_out), ((0, 0), (0, Np - dim_out)))
    bg = jnp.pad(b[dim_out:].reshape(1, dim_out), ((0, 0), (0, Np - dim_out)))
    # K is the reduction axis: it MUST be zero-padded. M is not padded.
    x2d = jnp.pad(x2d, ((0, 0), (0, Kp - dim_in)))

    grid = (grid_m, Np // tn, Kp // tk)
    out = pl.pallas_call(
        kernel,
        out_shape=jax.ShapeDtypeStruct((M, Np), out_dtype),
        grid_spec=pltpu.PrefetchScalarGridSpec(
            num_scalar_prefetch=0,
            grid=grid,
            in_specs=[
                pl.BlockSpec((tm, tk), lambda i, j, k: (i, k)),   # x
                pl.BlockSpec((tk, tn), lambda i, j, k: (k, j)),   # W_val
                pl.BlockSpec((tk, tn), lambda i, j, k: (k, j)),   # W_gate
                pl.BlockSpec((1, tn), lambda i, j, k: (0, j)),    # b_val
                pl.BlockSpec((1, tn), lambda i, j, k: (0, j)),    # b_gate
            ],
            out_specs=pl.BlockSpec((tm, tn), lambda i, j, k: (i, j)),
            scratch_shapes=[
                pltpu.VMEM((tm, tn), jnp.float32),
                pltpu.VMEM((tm, tn), jnp.float32),
            ],
        ),
        compiler_params=compiler_params,
    )(x2d, wv, wg, bv, bg)
    out = out[:, :dim_out]
    return out.reshape(*lead_shape, dim_out)


if __name__ == "__main__":
    # Small shapes consistent with the module: batch=2, seq=8, dim_in=32, dim_out=32.
    batch, seq, dim_in, dim_out = 2, 8, 32, 32
    key = jax.random.PRNGKey(0)
    kx, kw, kb = jax.random.split(key, 3)

    x = jax.random.normal(kx, (batch, seq, dim_in), dtype=jnp.float32)
    # nn.Linear(dim_in, dim_out*2): weight stored transposed, (dim_in, 2*dim_out).
    bound = 1.0 / (dim_in ** 0.5)
    w = jax.random.uniform(kw, (dim_in, dim_out * 2), jnp.float32, -bound, bound)
    b = jax.random.uniform(kb, (dim_out * 2,), jnp.float32, -bound, bound)

    out = geglu(x, w, b)
    jax.block_until_ready(out)

    proj_ref = x @ w + b
    val_ref, gate_ref = proj_ref[..., :dim_out], proj_ref[..., dim_out:]
    ref = val_ref * jax.nn.gelu(gate_ref, approximate=False)
    assert out.shape == (batch, seq, dim_out)
    assert jnp.allclose(out, ref, atol=1e-5, rtol=1e-5)

    # Second (still small) shape exercising the no-copy / no-pad fast path.
    b2_, s2_, di2, do2 = 2, 64, 256, 256
    k2x, k2w, k2b = jax.random.split(jax.random.PRNGKey(1), 3)
    x2 = jax.random.normal(k2x, (b2_, s2_, di2), dtype=jnp.float32)
    bound2 = 1.0 / (di2 ** 0.5)
    w2 = jax.random.uniform(k2w, (di2, do2 * 2), jnp.float32, -bound2, bound2)
    b2 = jax.random.uniform(k2b, (do2 * 2,), jnp.float32, -bound2, bound2)

    out2 = geglu(x2, w2, b2)
    jax.block_until_ready(out2)
    proj2 = x2 @ w2 + b2
    ref2 = proj2[..., :do2] * jax.nn.gelu(proj2[..., do2:], approximate=False)
    assert jnp.allclose(out2, ref2, atol=1e-4, rtol=1e-4)

    # bf16-operand variant (MXU-native, f32 accumulation); looser tolerance.
    out2_bf16 = geglu(x2, w2, b2, compute_dtype=jnp.bfloat16)
    jax.block_until_ready(out2_bf16)
    assert jnp.allclose(out2_bf16, ref2, atol=5e-2, rtol=5e-2)

    print("KERNEL_OK")
</pallas_src>

<mosaic_0001>
module attributes {stable_mosaic.version = 11 : i64} {
  func.func @_geglu_kernel(%arg0: i32, %arg1: i32, %arg2: i32, %arg3: memref<16x128xf32, #tpu.memory_space<vmem>>, %arg4: memref<128x128xf32, #tpu.memory_space<vmem>>, %arg5: memref<128x128xf32, #tpu.memory_space<vmem>>, %arg6: memref<1x128xf32, #tpu.memory_space<vmem>>, %arg7: memref<1x128xf32, #tpu.memory_space<vmem>>, %arg8: memref<16x128xf32, #tpu.memory_space<vmem>>, %arg9: memref<16x128xf32, #tpu.memory_space<vmem>>, %arg10: memref<16x128xf32, #tpu.memory_space<vmem>>) attributes {dimension_semantics = [#tpu.dimension_semantics<parallel>, #tpu.dimension_semantics<parallel>, #tpu.dimension_semantics<arbitrary>], iteration_bounds = array<i64: 1, 1, 1>, scalar_prefetch = 0 : i64, scratch_operands = 2 : i64, tpu.core_type = #tpu.core_type<tc>, window_params = [{transform_indices = @transform_0, window_bounds = array<i64: 16, 128>}, {transform_indices = @transform_1, window_bounds = array<i64: 128, 128>}, {transform_indices = @transform_2, window_bounds = array<i64: 128, 128>}, {transform_indices = @transform_3, window_bounds = array<i64: 1, 128>}, {transform_indices = @transform_4, window_bounds = array<i64: 1, 128>}, {transform_indices = @transform_5, window_bounds = array<i64: 16, 128>}]} {
    %c0_i32 = arith.constant 0 : i32
    %0 = arith.cmpi eq, %arg2, %c0_i32 : i32
    %1 = arith.extui %0 : i1 to i32
    %c0_i32_0 = arith.constant 0 : i32
    %2 = arith.cmpi ne, %1, %c0_i32_0 : i32
    scf.if %2 {
      %c0_17 = arith.constant 0 : index
      %c0_18 = arith.constant 0 : index
      %17 = vector.load %arg6[%c0_17, %c0_18] : memref<1x128xf32, #tpu.memory_space<vmem>>, vector<1x128xf32>
      %18 = vector.shape_cast %17 : vector<1x128xf32> to vector<1x128xf32>
      %19 = vector.broadcast %18 : vector<1x128xf32> to vector<16x128xf32>
      %c0_19 = arith.constant 0 : index
      %c0_20 = arith.constant 0 : index
      %20 = vector.load %arg9[%c0_19, %c0_20] : memref<16x128xf32, #tpu.memory_space<vmem>>, vector<16x128xf32>
      tpu.vector_store %arg9[%c0_19, %c0_20], %19 {strides = array<i32>} : memref<16x128xf32, #tpu.memory_space<vmem>>, vector<16x128xf32>,
      %c0_21 = arith.constant 0 : index
      %c0_22 = arith.constant 0 : index
      %21 = vector.load %arg7[%c0_21, %c0_22] : memref<1x128xf32, #tpu.memory_space<vmem>>, vector<1x128xf32>
      %22 = vector.shape_cast %21 : vector<1x128xf32> to vector<1x128xf32>
      %23 = vector.broadcast %22 : vector<1x128xf32> to vector<16x128xf32>
      %c0_23 = arith.constant 0 : index
      %c0_24 = arith.constant 0 : index
      %24 = vector.load %arg10[%c0_23, %c0_24] : memref<16x128xf32, #tpu.memory_space<vmem>>, vector<16x128xf32>
      tpu.vector_store %arg10[%c0_23, %c0_24], %23 {strides = array<i32>} : memref<16x128xf32, #tpu.memory_space<vmem>>, vector<16x128xf32>,
    } else {
    }
    %c0 = arith.constant 0 : index
    %c0_1 = arith.constant 0 : index
    %3 = vector.load %arg3[%c0, %c0_1] : memref<16x128xf32, #tpu.memory_space<vmem>>, vector<16x128xf32>
    %c0_2 = arith.constant 0 : index
    %c0_3 = arith.constant 0 : index
    %4 = vector.load %arg9[%c0_2, %c0_3] : memref<16x128xf32, #tpu.memory_space<vmem>>, vector<16x128xf32>
    %c0_4 = arith.constant 0 : index
    %c0_5 = arith.constant 0 : index
    %5 = vector.load %arg4[%c0_4, %c0_5] : memref<128x128xf32, #tpu.memory_space<vmem>>, vector<128x128xf32>
    %cst = arith.constant dense<0.000000e+00> : vector<16x128xf32>
    %6 = tpu.matmul %3, %5, %cst {dimension_numbers = #tpu.dot_dimension_numbers<[1], [0], [0], [1], [0, 0, 1, 1], [], []>} : vector<16x128xf32>, vector<128x128xf32>, vector<16x128xf32> -> vector<16x128xf32>
    %7 = arith.addf %4, %6 : vector<16x128xf32>
    %c0_6 = arith.constant 0 : index
    %c0_7 = arith.constant 0 : index
    %8 = vector.load %arg9[%c0_6, %c0_7] : memref<16x128xf32, #tpu.memory_space<vmem>>, vector<16x128xf32>
    tpu.vector_store %arg9[%c0_6, %c0_7], %7 {strides = array<i32>} : memref<16x128xf32, #tpu.memory_space<vmem>>, vector<16x128xf32>,
    %c0_8 = arith.constant 0 : index
    %c0_9 = arith.constant 0 : index
    %9 = vector.load %arg10[%c0_8, %c0_9] : memref<16x128xf32, #tpu.memory_space<vmem>>, vector<16x128xf32>
    %c0_10 = arith.constant 0 : index
    %c0_11 = arith.constant 0 : index
    %10 = vector.load %arg5[%c0_10, %c0_11] : memref<128x128xf32, #tpu.memory_space<vmem>>, vector<128x128xf32>
    %cst_12 = arith.constant dense<0.000000e+00> : vector<16x128xf32>
    %11 = tpu.matmul %3, %10, %cst_12 {dimension_numbers = #tpu.dot_dimension_numbers<[1], [0], [0], [1], [0, 0, 1, 1], [], []>} : vector<16x128xf32>, vector<128x128xf32>, vector<16x128xf32> -> vector<16x128xf32>
    %12 = arith.addf %9, %11 : vector<16x128xf32>
    %c0_13 = arith.constant 0 : index
    %c0_14 = arith.constant 0 : index
    %13 = vector.load %arg10[%c0_13, %c0_14] : memref<16x128xf32, #tpu.memory_space<vmem>>, vector<16x128xf32>
    tpu.vector_store %arg10[%c0_13, %c0_14], %12 {strides = array<i32>} : memref<16x128xf32, #tpu.memory_space<vmem>>, vector<16x128xf32>,
    %c0_i32_15 = arith.constant 0 : i32
    %14 = arith.cmpi eq, %arg2, %c0_i32_15 : i32
    %15 = arith.extui %14 : i1 to i32
    %c0_i32_16 = arith.constant 0 : i32
    %16 = arith.cmpi ne, %15, %c0_i32_16 : i32
    scf.if %16 {
      %c0_17 = arith.constant 0 : index
      %c0_18 = arith.constant 0 : index
      %17 = vector.load %arg9[%c0_17, %c0_18] : memref<16x128xf32, #tpu.memory_space<vmem>>, vector<16x128xf32>
      %c0_19 = arith.constant 0 : index
      %c0_20 = arith.constant 0 : index
      %18 = vector.load %arg10[%c0_19, %c0_20] : memref<16x128xf32, #tpu.memory_space<vmem>>, vector<16x128xf32>
      %cst_21 = arith.constant 5.000000e-01 : f32
      %19 = vector.broadcast %cst_21 : f32 to vector<16x128xf32>
      %20 = arith.mulf %19, %18 : vector<16x128xf32>
      %cst_22 = arith.constant 0.707106769 : f32
      %21 = vector.broadcast %cst_22 : f32 to vector<16x128xf32>
      %22 = arith.mulf %18, %21 : vector<16x128xf32>
      %23 = math.erf %22 : vector<16x128xf32>
      %cst_23 = arith.constant 1.000000e+00 : f32
      %24 = vector.broadcast %cst_23 : f32 to vector<16x128xf32>
      %25 = arith.addf %24, %23 : vector<16x128xf32>
      %26 = arith.mulf %20, %25 : vector<16x128xf32>
      %27 = arith.mulf %17, %26 : vector<16x128xf32>
      %c0_24 = arith.constant 0 : index
      %c0_25 = arith.constant 0 : index
      %28 = vector.load %arg8[%c0_24, %c0_25] : memref<16x128xf32, #tpu.memory_space<vmem>>, vector<16x128xf32>
      tpu.vector_store %arg8[%c0_24, %c0_25], %27 {strides = array<i32>} : memref<16x128xf32, #tpu.memory_space<vmem>>, vector<16x128xf32>,
    } else {
    }
    return
  }
  func.func @transform_0(%arg0: i32, %arg1: i32, %arg2: i32) -> (i32, i32) {
    %c0_i32 = arith.constant 0 : i32
    return %arg0, %arg2 : i32, i32
  }
  func.func @transform_1(%arg0: i32, %arg1: i32, %arg2: i32) -> (i32, i32) {
    %c0_i32 = arith.constant 0 : i32
    return %arg2, %arg1 : i32, i32
  }
  func.func @transform_2(%arg0: i32, %arg1: i32, %arg2: i32) -> (i32, i32) {
    %c0_i32 = arith.constant 0 : i32
    return %arg2, %arg1 : i32, i32
  }
  func.func @transform_3(%arg0: i32, %arg1: i32, %arg2: i32) -> (i32, i32) {
    %c0_i32 = arith.constant 0 : i32
    %c0_i32_0 = arith.constant 0 : i32
    return %c0_i32, %arg1 : i32, i32
  }
  func.func @transform_4(%arg0: i32, %arg1: i32, %arg2: i32) -> (i32, i32) {
    %c0_i32 = arith.constant 0 : i32
    %c0_i32_0 = arith.constant 0 : i32
    return %c0_i32, %arg1 : i32, i32
  }
  func.func @transform_5(%arg0: i32, %arg1: i32, %arg2: i32) -> (i32, i32) {
    %c0_i32 = arith.constant 0 : i32
    return %arg0, %arg1 : i32, i32
  }
}

</mosaic_0001>

<llo_original>
// kernel: tpu_custom_call.1
$region0: #{tpu_custom_call.1}
  #allocation0 [shape = 'u32[]', space=smem, size = 0x4, offset = 0x4, fixed_abs, tag = 'smem constant byte address 0x4 - core index']
  #allocation1 [shape = 'u32[72,128]{1,0:T(1,128)}', space=vmem, size = 0x9000, scoped, tag = 'internal scratch']
  #allocation2 [shape = 'f32[16,128]{1,0:T(8,128)}', space=vmem, size = 0x2000, scoped, tag = 'scratch operand']
  #allocation3 [shape = 'f32[16,128]{1,0:T(8,128)}', space=vmem, size = 0x2000, scoped, tag = 'scratch operand']
  %s0 = inlined_call_operand.hbm [shape: f32[16,128], index: 0, kind: input, shape index: {}]
  %s1 = inlined_call_operand.hbm [shape: f32[128,128], index: 1, kind: input, shape index: {}]
  %s2 = inlined_call_operand.hbm [shape: f32[128,128], index: 2, kind: input, shape index: {}]
  %s3 = inlined_call_operand.vmem [shape: f32[1,128], index: 3, kind: input, shape index: {}]
  %s4 = inlined_call_operand.vmem [shape: f32[1,128], index: 4, kind: input, shape index: {}]
  %s5 = inlined_call_operand.hbm [shape: f32[16,128], index: 5, kind: output, shape index: {}]
  %s6 = sld [smem:[#allocation0]]
  $region50: #{tpu_custom_call.1} parent=0
    _
  %s8 = ssub.s32 1, %s6
  %s9 = scalar_select 0, %s8, %s6
  $region1: #{tpu_custom_call.1} parent=0
    #allocation4 [shape = 'u8[8192]{0}', space=vmem, size = 0x2000, scoped, tag = 'input window, operand 0, single buffered']
    #allocation5 [shape = 's32[1]{0}', space=sflag, size = 0x4, scoped, tag = 'scoped memory for tpu_custom_call.1']
    #allocation6 [shape = 's32[1]{0}', space=sflag, size = 0x4, scoped, tag = 'scoped memory for tpu_custom_call.1']
    #allocation7 [shape = 'u8[65536]{0}', space=vmem, size = 0x10000, scoped, tag = 'input window, operand 1, single buffered']
    #allocation8 [shape = 's32[1]{0}', space=sflag, size = 0x4, scoped, tag = 'scoped memory for tpu_custom_call.1']
    #allocation9 [shape = 'u8[65536]{0}', space=vmem, size = 0x10000, scoped, tag = 'input window, operand 2, single buffered']
    #allocation10 [shape = 'u8[8192]{0}', space=vmem, size = 0x2000, scoped, tag = 'output window, operand 0, single buffered']
    %10 = vsyncpa [#allocation5], 0
    %11 = vsyncpa [#allocation8], 0
    %12 = vsyncpa [#allocation6], 0
    // Predicated region
    $region2: #{tpu_custom_call.1} parent=1 // pred_check
      _
    $region3: #{tpu_custom_call.1} parent=1 // pred_check_branch
      %14 = sbr.rel (0) target = $region5
    $region4: #{tpu_custom_call.1} parent=1 // pred_region
      %16 = vsyncadd [#allocation5], 0
      %s17 = sshll.u32 %s0, 4
      %s18 = int_to_ptr.hbm [resolvable:$true] %s17
      %s19 = sshll.u32 [#allocation4], 4
      %s20 = int_to_ptr.vmem [resolvable:$true] %s19
      %25 = dma.hbm_to_vmem [thread:$0]  %s18, 256, %s20, [#allocation5], 128, 128, 8
    $region5: #{tpu_custom_call.1} parent=1 // pred_fallthru
      _
    // Predicated region
    $region6: #{tpu_custom_call.1} parent=1 // pred_check
      _
    $region7: #{tpu_custom_call.1} parent=1 // pred_check_branch
      %27 = sbr.rel (0) target = $region9
    $region8: #{tpu_custom_call.1} parent=1 // pred_region
      %29 = vsyncadd [#allocation8], 0
      %s30 = sshll.u32 %s1, 4
      %s31 = int_to_ptr.hbm [resolvable:$true] %s30
      %s32 = sshll.u32 [#allocation7], 4
      %s33 = int_to_ptr.vmem [resolvable:$true] %s32
      %38 = dma.hbm_to_vmem [thread:$0]  %s31, 2048, %s33, [#allocation8], 128, 128, 8
    $region9: #{tpu_custom_call.1} parent=1 // pred_fallthru
      _
    // Predicated region
    $region10: #{tpu_custom_call.1} parent=1 // pred_check
      _
    $region11: #{tpu_custom_call.1} parent=1 // pred_check_branch
      %40 = sbr.rel (0) target = $region13
    $region12: #{tpu_custom_call.1} parent=1 // pred_region
      %42 = vsyncadd [#allocation8], 0
      %s43 = sshll.u32 %s2, 4
      %s44 = int_to_ptr.hbm [resolvable:$true] %s43
      %s45 = sshll.u32 [#allocation9], 4
      %s46 = int_to_ptr.vmem [resolvable:$true] %s45
      %51 = dma.hbm_to_vmem [thread:$0]  %s44, 2048, %s46, [#allocation8], 128, 128, 8
    $region13: #{tpu_custom_call.1} parent=1 // pred_fallthru
      _
    // Predicated region
    $region14: #{tpu_custom_call.1} parent=1 // pred_check
      _
    $region15: #{tpu_custom_call.1} parent=1 // pred_check_branch
      %53 = sbr.rel (0) target = $region17
    $region16: #{tpu_custom_call.1} parent=1 // pred_region
      _
    $region17: #{tpu_custom_call.1} parent=1 // pred_fallthru
      _
    // Predicated region
    $region18: #{tpu_custom_call.1} parent=1 // pred_check
      _
    $region19: #{tpu_custom_call.1} parent=1 // pred_check_branch
      %55 = sbr.rel (0) target = $region21
    $region20: #{tpu_custom_call.1} parent=1 // pred_region
      _
    $region21: #{tpu_custom_call.1} parent=1 // pred_fallthru
      _
    // Predicated region
    $region22: #{tpu_custom_call.1} parent=1 // pred_check
      _
    $region23: #{tpu_custom_call.1} parent=1 // pred_check_branch
      %57 = sbr.rel (0) target = $region25
    $region24: #{tpu_custom_call.1} parent=1 // pred_region
      %59 = dma.done [#allocation5], 256
    $region25: #{tpu_custom_call.1} parent=1 // pred_fallthru
      _
    // Predicated region
    $region26: #{tpu_custom_call.1} parent=1 // pred_check
      _
    $region27: #{tpu_custom_call.1} parent=1 // pred_check_branch
      %61 = sbr.rel (0) target = $region29
    $region28: #{tpu_custom_call.1} parent=1 // pred_region
      %63 = dma.done [#allocation8], 2048
    $region29: #{tpu_custom_call.1} parent=1 // pred_fallthru
      _
    // Predicated region
    $region30: #{tpu_custom_call.1} parent=1 // pred_check
      _
    $region31: #{tpu_custom_call.1} parent=1 // pred_check_branch
      %65 = sbr.rel (0) target = $region33
    $region32: #{tpu_custom_call.1} parent=1 // pred_region
      %67 = dma.done [#allocation8], 2048
    $region33: #{tpu_custom_call.1} parent=1 // pred_fallthru
      _
    %p68 = scmp.eq.s32.totalorder 0, 0
    // Predicated region
    $region34: #{tpu_custom_call.1} parent=1 // pred_check
      %p69 = pneg %p68
    $region35: #{tpu_custom_call.1} parent=1 // pred_check_branch
      %71 = sbr.rel (%p69) target = $region37
    $region36: #{tpu_custom_call.1} parent=1 // pred_region
      %v72 = vld [vmem:[%s3] sm:$0x1]
      %v74 = vperm.slane %v72, 0
      %76 = vst [vmem:[#allocation2] sm:$0xff] %v74
      %77 = vst [vmem:[#allocation2 + $0x8] sm:$0xff] %v74
      %v78 = vld [vmem:[%s4] sm:$0x1]
      %v80 = vperm.slane %v78, 0
      %82 = vst [vmem:[#allocation3] sm:$0xff] %v80
      %83 = vst [vmem:[#allocation3 + $0x8] sm:$0xff] %v80
    $region37: #{tpu_custom_call.1} parent=1 // pred_fallthru
      _
    %v84 = vld [vmem:[#allocation4] sm:$0xff]
    %v85 = vld [vmem:[#allocation4 + $0x8] sm:$0xff]
    %v86 = vld [vmem:[#allocation2] sm:$0xff]
    %v87 = vld [vmem:[#allocation2 + $0x8] sm:$0xff]
    %v88 = vld [vmem:[#allocation7] sm:$0xff]
    %v89 = vld [vmem:[#allocation7 + $0x8] sm:$0xff]
    %v90 = vld [vmem:[#allocation7 + $0x10] sm:$0xff]
    %v91 = vld [vmem:[#allocation7 + $0x18] sm:$0xff]
    %v92 = vld [vmem:[#allocation7 + $0x20] sm:$0xff]
    %v93 = vld [vmem:[#allocation7 + $0x28] sm:$0xff]
    %v94 = vld [vmem:[#allocation7 + $0x30] sm:$0xff]
    %v95 = vld [vmem:[#allocation7 + $0x38] sm:$0xff]
    %v96 = vld [vmem:[#allocation7 + $0x40] sm:$0xff]
    %v97 = vld [vmem:[#allocation7 + $0x48] sm:$0xff]
    %v98 = vld [vmem:[#allocation7 + $0x50] sm:$0xff]
    %v99 = vld [vmem:[#allocation7 + $0x58] sm:$0xff]
    %v100 = vld [vmem:[#allocation7 + $0x60] sm:$0xff]
    %v101 = vld [vmem:[#allocation7 + $0x68] sm:$0xff]
    %v102 = vld [vmem:[#allocation7 + $0x70] sm:$0xff]
    %v103 = vld [vmem:[#allocation7 + $0x78] sm:$0xff]
    %104 = vmatpush.msra.mxu0 %v103
    %105 = vmatpush.msra.mxu0 %v102
    %106 = vmatpush.msra.mxu0 %v101
    %107 = vmatpush.msra.mxu0 %v100
    %108 = vmatpush.msra.mxu0 %v99
    %109 = vmatpush.msra.mxu0 %v98
    %110 = vmatpush.msra.mxu0 %v97
    %111 = vmatpush.msra.mxu0 %v96
    %112 = vmatpush.msra.mxu0 %v95
    %113 = vmatpush.msra.mxu0 %v94
    %114 = vmatpush.msra.mxu0 %v93
    %115 = vmatpush.msra.mxu0 %v92
    %116 = vmatpush.msra.mxu0 %v91
    %117 = vmatpush.msra.mxu0 %v90
    %118 = vmatpush.msra.mxu0 %v89
    %119 = vmatpush.msra.mxu0 %v88
    %120 = vmatmul.f32.gmra.mxu0 %v84
    %v121 = vpop.f32.mrf.mxu0
    %v122 = vadd.f32 0.0, %v121
    %123 = vmatmul.f32.gmra.mxu0 %v85
    %v124 = vpop.f32.mrf.mxu0
    %v125 = vadd.f32 0.0, %v124
    %126 = vdwg.mxu0
    %v127 = vadd.f32 %v86, %v122
    %v128 = vadd.f32 %v87, %v125
    %129 = vst [vmem:[#allocation2] sm:$0xff] %v127
    %130 = vst [vmem:[#allocation2 + $0x8] sm:$0xff] %v128
    %v131 = vld [vmem:[#allocation3] sm:$0xff]
    %v132 = vld [vmem:[#allocation3 + $0x8] sm:$0xff]
    %v133 = vld [vmem:[#allocation9] sm:$0xff]
    %v134 = vld [vmem:[#allocation9 + $0x8] sm:$0xff]
    %v135 = vld [vmem:[#allocation9 + $0x10] sm:$0xff]
    %v136 = vld [vmem:[#allocation9 + $0x18] sm:$0xff]
    %v137 = vld [vmem:[#allocation9 + $0x20] sm:$0xff]
    %v138 = vld [vmem:[#allocation9 + $0x28] sm:$0xff]
    %v139 = vld [vmem:[#allocation9 + $0x30] sm:$0xff]
    %v140 = vld [vmem:[#allocation9 + $0x38] sm:$0xff]
    %v141 = vld [vmem:[#allocation9 + $0x40] sm:$0xff]
    %v142 = vld [vmem:[#allocation9 + $0x48] sm:$0xff]
    %v143 = vld [vmem:[#allocation9 + $0x50] sm:$0xff]
    %v144 = vld [vmem:[#allocation9 + $0x58] sm:$0xff]
    %v145 = vld [vmem:[#allocation9 + $0x60] sm:$0xff]
    %v146 = vld [vmem:[#allocation9 + $0x68] sm:$0xff]
    %v147 = vld [vmem:[#allocation9 + $0x70] sm:$0xff]
    %v148 = vld [vmem:[#allocation9 + $0x78] sm:$0xff]
    %149 = vmatpush.msra.mxu0 %v148
    %150 = vmatpush.msra.mxu0 %v147
    %151 = vmatpush.msra.mxu0 %v146
    %152 = vmatpush.msra.mxu0 %v145
    %153 = vmatpush.msra.mxu0 %v144
    %154 = vmatpush.msra.mxu0 %v143
    %155 = vmatpush.msra.mxu0 %v142
    %156 = vmatpush.msra.mxu0 %v141
    %157 = vmatpush.msra.mxu0 %v140
    %158 = vmatpush.msra.mxu0 %v139
    %159 = vmatpush.msra.mxu0 %v138
    %160 = vmatpush.msra.mxu0 %v137
    %161 = vmatpush.msra.mxu0 %v136
    %162 = vmatpush.msra.mxu0 %v135
    %163 = vmatpush.msra.mxu0 %v134
    %164 = vmatpush.msra.mxu0 %v133
    %165 = vmatmul.f32.gmra.mxu0 %v84
    %v166 = vpop.f32.mrf.mxu0
    %v167 = vadd.f32 0.0, %v166
    %168 = vmatmul.f32.gmra.mxu0 %v85
    %v169 = vpop.f32.mrf.mxu0
    %v170 = vadd.f32 0.0, %v169
    %171 = vdwg.mxu0
    %v172 = vadd.f32 %v131, %v167
    %v173 = vadd.f32 %v132, %v170
    %174 = vst [vmem:[#allocation3] sm:$0xff] %v172
    %175 = vst [vmem:[#allocation3 + $0x8] sm:$0xff] %v173
    // Predicated region
    $region38: #{tpu_custom_call.1} parent=1 // pred_check
      %p176 = pneg %p68
    $region39: #{tpu_custom_call.1} parent=1 // pred_check_branch
      %178 = sbr.rel (%p176) target = $region41
    $region40: #{tpu_custom_call.1} parent=1 // pred_region
      %v179 = vld [vmem:[#allocation2] sm:$0xff]
      %v180 = vld [vmem:[#allocation2 + $0x8] sm:$0xff]
      %v181 = vld [vmem:[#allocation3] sm:$0xff]
      %v182 = vld [vmem:[#allocation3 + $0x8] sm:$0xff]
      %v183 = vmul.f32 %v181, 0.5
      %v184 = vmul.f32 %v182, 0.5
      %v185 = vmul.f32 %v181, 0.70710677
      %v186 = vmul.f32 %v182, 0.70710677
      %v187 = vmul.f32 %v185, %v185
      %v188 = vmin.f32 16.0, %v187
      %v189 = vmul.f32 %v188, 2.1237322e-06
      %v190 = vadd.f32 %v189, 0.00028619796
      %v191 = vmul.f32 %v188, %v190
      %v192 = vadd.f32 %v191, 0.0036580483
      %v193 = vmul.f32 %v188, %v192
      %v194 = vadd.f32 %v193, 0.05243302
      %v195 = vmul.f32 %v188, %v194
      %v196 = vadd.f32 %v195, 0.18741608
      %v197 = vmul.f32 %v188, %v196
      %v198 = vadd.f32 %v197, 1.1283791
      %v199 = vmul.f32 %v185, %v198
      %v200 = vmul.f32 %v188, 3.8918573e-05
      %v201 = vadd.f32 %v200, 0.001143296
      %v202 = vmul.f32 %v188, %v201
      %v203 = vadd.f32 %v202, 0.014752088
      %v204 = vmul.f32 %v188, %v203
      %v205 = vadd.f32 %v204, 0.112945676
      %v206 = vmul.f32 %v188, %v205
      %v207 = vadd.f32 %v206, 0.4994258
      %v208 = vmul.f32 %v188, %v207
      %v209 = vadd.f32 %v208, 1.0
      %v210 = vrcp.pop %v209
      %v211 = vmul.f32 %v209, %v210
      %v212 = vsub.f32 1.0, %v211
      %v213 = vmul.f32 %v210, %v212
      %v214 = vadd.f32 %v210, %v213
      %vm215 = vweird.f32 %v209
      %vm216 = vweird.f32 %v210
      %vm217 = vmor %vm215, %vm216
      %v218 = vsel %vm217, %v210, %v214
      %v219 = vand.u32 2147483647, %v209
      %vm220 = vcmp.eq.f32.partialorder %v219, 8.507059e+37
      %v221 = vand.u32 %v209, 2147483648
      %v222 = vor.u32 1.1754944e-38, %v221
      %v223 = vsel %vm220, %v222, %v218
      %v224 = vmul.f32 %v199, %v223
      %v225 = vmin.f32 %v224, 1.0
      %v226 = vmax.f32 %v225, -1.0
      %v227 = vmul.f32 %v186, %v186
      %v228 = vmin.f32 16.0, %v227
      %v229 = vmul.f32 %v228, 2.1237322e-06
      %v230 = vadd.f32 %v229, 0.00028619796
      %v231 = vmul.f32 %v228, %v230
      %v232 = vadd.f32 %v231, 0.0036580483
      %v233 = vmul.f32 %v228, %v232
      %v234 = vadd.f32 %v233, 0.05243302
      %v235 = vmul.f32 %v228, %v234
      %v236 = vadd.f32 %v235, 0.18741608
      %v237 = vmul.f32 %v228, %v236
      %v238 = vadd.f32 %v237, 1.1283791
      %v239 = vmul.f32 %v186, %v238
      %v240 = vmul.f32 %v228, 3.8918573e-05
      %v241 = vadd.f32 %v240, 0.001143296
      %v242 = vmul.f32 %v228, %v241
      %v243 = vadd.f32 %v242, 0.014752088
      %v244 = vmul.f32 %v228, %v243
      %v245 = vadd.f32 %v244, 0.112945676
      %v246 = vmul.f32 %v228, %v245
      %v247 = vadd.f32 %v246, 0.4994258
      %v248 = vmul.f32 %v228, %v247
      %v249 = vadd.f32 %v248, 1.0
      %v250 = vrcp.pop %v249
      %v251 = vmul.f32 %v249, %v250
      %v252 = vsub.f32 1.0, %v251
      %v253 = vmul.f32 %v250, %v252
      %v254 = vadd.f32 %v250, %v253
      %vm255 = vweird.f32 %v249
      %vm256 = vweird.f32 %v250
      %vm257 = vmor %vm255, %vm256
      %v258 = vsel %vm257, %v250, %v254
      %v259 = vand.u32 2147483647, %v249
      %vm260 = vcmp.eq.f32.partialorder %v259, 8.507059e+37
      %v261 = vand.u32 %v249, 2147483648
      %v262 = vor.u32 1.1754944e-38, %v261
      %v263 = vsel %vm260, %v262, %v258
      %v264 = vmul.f32 %v239, %v263
      %v265 = vmin.f32 %v264, 1.0
      %v266 = vmax.f32 %v265, -1.0
      %v267 = vadd.f32 %v226, 1.0
      %v268 = vadd.f32 %v266, 1.0
      %v269 = vmul.f32 %v183, %v267
      %v270 = vmul.f32 %v184, %v268
      %v271 = vmul.f32 %v179, %v269
      %v272 = vmul.f32 %v180, %v270
      %273 = vst [vmem:[#allocation10] sm:$0xff] %v271
      %274 = vst [vmem:[#allocation10 + $0x8] sm:$0xff] %v272
    $region41: #{tpu_custom_call.1} parent=1 // pred_fallthru
      _
    // Predicated region
    $region42: #{tpu_custom_call.1} parent=1 // pred_check
      _
    $region43: #{tpu_custom_call.1} parent=1 // pred_check_branch
      %276 = sbr.rel (0) target = $region45
    $region44: #{tpu_custom_call.1} parent=1 // pred_region
      %278 = vsyncadd [#allocation6], 0
      %s279 = sshll.u32 [#allocation10], 4
      %s280 = int_to_ptr.vmem [resolvable:$true] %s279
      %s281 = sshll.u32 %s5, 4
      %s282 = int_to_ptr.hbm [resolvable:$true] %s281
      %287 = dma.vmem_to_hbm [thread:$0]  %s280, 256, %s282, [#allocation6], 128, 128, 8
    $region45: #{tpu_custom_call.1} parent=1 // pred_fallthru
      _
    // Predicated region
    $region46: #{tpu_custom_call.1} parent=1 // pred_check
      _
    $region47: #{tpu_custom_call.1} parent=1 // pred_check_branch
      %289 = sbr.rel (0) target = $region49
    $region48: #{tpu_custom_call.1} parent=1 // pred_region
      %291 = dma.done [#allocation6], 256
    $region49: #{tpu_custom_call.1} parent=1 // pred_fallthru
      _
    %292 = vsyncpa [#allocation5], 1
    %293 = vsyncpa [#allocation8], 1
    %294 = vsyncpa [#allocation6], 1

</llo_original>
